<compile_context>
chip_gen: v6e
topology: v6e:2x2x1
jax: 0.10.0
libtpu: 0.0.40
codegen_flags: <defaults>
</compile_context>

<pallas_src>
from functools import partial

import jax
import jax.numpy as jnp
from jax import lax
from jax.experimental import pallas as pl
from jax.experimental.pallas import tpu as pltpu
import numpy as np


def _consistency_loss_kernel(p1_ref, p2_ref, tbl_ref, out_ref, *, total_rows, inv_b):
    i = pl.program_id(0)

    # ---- init resident scalar accumulator on first grid step ----
    @pl.when(i == 0)
    def _init():
        out_ref[...] = jnp.zeros_like(out_ref)

    # ---- argmax over pred1 logits (first occurrence on ties) ----
    p1 = p1_ref[...].astype(jnp.float32)                     # [TB, C1]
    tb, c1 = p1.shape
    col1 = lax.broadcasted_iota(jnp.int32, (tb, c1), 1)
    row_max = jnp.max(p1, axis=1, keepdims=True)
    argmax_idx = jnp.min(
        jnp.where(p1 == row_max, col1, c1), axis=1, keepdims=True
    )                                                         # [TB, 1]
    onehot = (col1 == argmax_idx).astype(jnp.float32)         # [TB, C1]

    # ---- gather soft labels via one-hot @ table (MXU gather) ----
    labels = jnp.dot(onehot, tbl_ref[...].astype(jnp.float32),
                     preferred_element_type=jnp.float32)      # [TB, C2]

    # ---- cross entropy with soft targets (max-shifted log-softmax) ----
    # per-row: sum_c labels*log_softmax = sum_c labels*shifted - (sum_c labels)*lse
    p2 = p2_ref[...].astype(jnp.float32)                      # [TB, C2]
    m = jnp.max(p2, axis=1, keepdims=True)
    shifted = p2 - m
    lse = jnp.log(jnp.sum(jnp.exp(shifted), axis=1, keepdims=True))   # [TB, 1]
    num = jnp.sum(labels * shifted, axis=1, keepdims=True)            # [TB, 1]
    lbl_sum = jnp.sum(labels, axis=1, keepdims=True)                   # [TB, 1] (0 or 1)
    row_val = num - lbl_sum * lse                                      # [TB, 1]

    # ---- mask rows of a padded final tile, accumulate pure sum ----
    rows = i * tb + lax.broadcasted_iota(jnp.int32, (tb, 1), 0)        # [TB, 1]
    valid = rows < total_rows
    tile_sum = jnp.sum(jnp.where(valid, row_val, 0.0))

    out_ref[...] += -tile_sum

    # ---- finalize: single multiply by precomputed 1/B ----
    @pl.when(i == pl.num_programs(0) - 1)
    def _finalize():
        out_ref[...] = out_ref[...] * jnp.float32(inv_b)


def consistency_loss(pred1_logits, pred2_logits, table_matrix, *, block_rows=512):
    """Pallas implementation of ConsistencyLoss.forward. Returns scalar f32."""
    b, c1 = pred1_logits.shape
    b2, c2 = pred2_logits.shape
    assert b == b2, "batch mismatch between pred1 and pred2"
    assert table_matrix.shape == (c1, c2), "table shape must be [C1, C2]"

    # Batch tile size: full array when small, else a sublane-aligned (mult of 8) tile.
    if b <= block_rows:
        tb = b
    else:
        tb = max(8, (block_rows // 8) * 8)
    grid = (pl.cdiv(b, tb),)

    isz1 = jnp.dtype(pred1_logits.dtype).itemsize
    isz2 = jnp.dtype(pred2_logits.dtype).itemsize
    iszt = jnp.dtype(table_matrix.dtype).itemsize

    cost = pl.CostEstimate(
        flops=2 * b * c1 * c2,                   # onehot @ table dominates
        transcendentals=b * (c2 + 1),            # exp over C2 + log per row
        bytes_accessed=b * c1 * isz1 + b * c2 * isz2 + c1 * c2 * iszt + 4,
    )

    # Double-buffered input tiles + one copy of the table, with headroom;
    # clamped so the request is safe on v7x's smaller (64 MiB) VMEM.
    tile_bytes = 2 * tb * (c1 * isz1 + c2 * isz2)
    table_bytes = c1 * c2 * iszt
    vmem_limit = int(min(max(2 * (tile_bytes + table_bytes) + (1 << 20), 32 << 20),
                         48 << 20))

    out = pl.pallas_call(
        partial(_consistency_loss_kernel, total_rows=b, inv_b=1.0 / b),
        out_shape=jax.ShapeDtypeStruct((1, 1), jnp.float32),
        grid=grid,
        in_specs=[
            pl.BlockSpec((tb, c1), lambda i: (i, 0)),            # pred1 tile, pipelined
            pl.BlockSpec((tb, c2), lambda i: (i, 0)),            # pred2 tile, pipelined
            pl.BlockSpec(memory_space=pltpu.MemorySpace.VMEM),   # whole table, single copy
        ],
        out_specs=pl.BlockSpec((1, 1), lambda i: (0, 0)),        # resident accumulator
        compiler_params=pltpu.CompilerParams(
            dimension_semantics=("arbitrary",),                  # batch axis is a reduction
            vmem_limit_bytes=vmem_limit,
        ),
        cost_estimate=cost,
    )(pred1_logits, pred2_logits, table_matrix)
    return out[0, 0]


def build_table_matrix(table, num_pred1_classes, num_pred2_classes):
    """Densify the pred1->pred2 index table into a [C1, C2] soft-label matrix."""
    tbl = np.zeros((num_pred1_classes, num_pred2_classes), dtype=np.float32)
    for k, idxs in table.items():
        if len(idxs) > 0:
            tbl[k, np.asarray(idxs, dtype=np.int64)] = 1.0 / len(idxs)
    return jnp.asarray(tbl)


def reference_loss(pred1_logits, pred2_logits, table_matrix):
    idx = jnp.argmax(pred1_logits, axis=1)
    labels = table_matrix[idx]
    log_sm = jax.nn.log_softmax(pred2_logits.astype(jnp.float32), axis=1)
    return -jnp.mean(jnp.sum(labels * log_sm, axis=1))


if __name__ == "__main__":
    B, C1, C2 = 8, 16, 32

    # Deterministic synthetic pred1->pred2 table (some entries empty, as real tables may be).
    table = {k: [(k * 3 + j) % C2 for j in range(k % 4)] for k in range(C1)}
    table_matrix = build_table_matrix(table, C1, C2)

    key = jax.random.PRNGKey(0)
    k1, k2 = jax.random.split(key)
    pred1_logits = jax.random.normal(k1, (B, C1), dtype=jnp.float32)
    pred2_logits = jax.random.normal(k2, (B, C2), dtype=jnp.float32)

    loss = jax.jit(consistency_loss)(pred1_logits, pred2_logits, table_matrix)
    jax.block_until_ready(loss)

    ref = reference_loss(pred1_logits, pred2_logits, table_matrix)
    assert jnp.allclose(loss, ref, atol=1e-5, rtol=1e-5), (loss, ref)

    # Exercise the multi-step grid path (partial final tile) as well.
    B2 = 20
    k3, k4 = jax.random.split(k2)
    p1b = jax.random.normal(k3, (B2, C1), dtype=jnp.float32)
    p2b = jax.random.normal(k4, (B2, C2), dtype=jnp.float32)
    loss2 = jax.jit(partial(consistency_loss, block_rows=8))(p1b, p2b, table_matrix)
    jax.block_until_ready(loss2)
    ref2 = reference_loss(p1b, p2b, table_matrix)
    assert jnp.allclose(loss2, ref2, atol=1e-5, rtol=1e-5), (loss2, ref2)

    print("KERNEL_OK")
</pallas_src>

<mosaic_0001>
module attributes {stable_mosaic.version = 11 : i64} {
  func.func @_consistency_loss_kernel(%arg0: i32, %arg1: memref<8x16xf32, #tpu.memory_space<vmem>>, %arg2: memref<8x32xf32, #tpu.memory_space<vmem>>, %arg3: memref<16x32xf32, #tpu.memory_space<vmem>>, %arg4: memref<1x1xf32, #tpu.memory_space<vmem>>) attributes {dimension_semantics = [#tpu.dimension_semantics<arbitrary>], iteration_bounds = array<i64: 1>, scalar_prefetch = 0 : i64, scratch_operands = 0 : i64, tpu.core_type = #tpu.core_type<tc>, window_params = [{transform_indices = @transform_0, window_bounds = array<i64: 8, 16>}, {transform_indices = @transform_1, window_bounds = array<i64: 8, 32>}, {pipeline_mode = #tpu.pipeline_mode<synchronous>, transform_indices = @transform_2, window_bounds = array<i64: 16, 32>}, {pipeline_mode = #tpu.pipeline_mode<synchronous>, transform_indices = @transform_3, window_bounds = array<i64: 1, 1>}]} {
    %c0_i32 = arith.constant 0 : i32
    %0 = arith.cmpi eq, %arg0, %c0_i32 : i32
    %1 = arith.extui %0 : i1 to i32
    %c0_i32_0 = arith.constant 0 : i32
    %2 = arith.cmpi ne, %1, %c0_i32_0 : i32
    scf.if %2 {
      %cst_22 = arith.constant 0.000000e+00 : f32
      %55 = vector.broadcast %cst_22 : f32 to vector<1x1xf32>
      %c0_23 = arith.constant 0 : index
      %c0_24 = arith.constant 0 : index
      %56 = vector.load %arg4[%c0_23, %c0_24] : memref<1x1xf32, #tpu.memory_space<vmem>>, vector<1x1xf32>
      tpu.vector_store %arg4[%c0_23, %c0_24], %55 {strides = array<i32>} : memref<1x1xf32, #tpu.memory_space<vmem>>, vector<1x1xf32>,
    } else {
    }
    %c0 = arith.constant 0 : index
    %c0_1 = arith.constant 0 : index
    %3 = vector.load %arg1[%c0, %c0_1] : memref<8x16xf32, #tpu.memory_space<vmem>>, vector<8x16xf32>
    %4 = tpu.iota {dimensions = array<i32: 1>} : vector<8x16xi32>
    %cst = arith.constant dense<0xFF800000> : vector<8xf32>
    %5 = vector.multi_reduction <maximumf>, %3, %cst [1] : vector<8x16xf32> to vector<8xf32>
    %6 = vector.shape_cast %5 : vector<8xf32> to vector<8x1xf32>
    %7 = vector.broadcast %6 : vector<8x1xf32> to vector<8x16xf32>
    %8 = arith.cmpf oeq, %3, %7 : vector<8x16xf32>
    %c16_i32 = arith.constant 16 : i32
    %9 = vector.broadcast %c16_i32 : i32 to vector<8x16xi32>
    %10 = arith.select %8, %4, %9 : vector<8x16xi1>, vector<8x16xi32>
    %cst_2 = arith.constant dense<2147483647> : vector<8xi32>
    %11 = vector.multi_reduction <minsi>, %10, %cst_2 [1] : vector<8x16xi32> to vector<8xi32>
    %12 = vector.shape_cast %11 : vector<8xi32> to vector<8x1xi32>
    %13 = vector.broadcast %12 : vector<8x1xi32> to vector<8x16xi32>
    %14 = arith.cmpi eq, %4, %13 : vector<8x16xi32>
    %15 = arith.extui %14 : vector<8x16xi1> to vector<8x16xi32>
    %16 = arith.sitofp %15 : vector<8x16xi32> to vector<8x16xf32>
    %c0_3 = arith.constant 0 : index
    %c0_4 = arith.constant 0 : index
    %17 = vector.load %arg3[%c0_3, %c0_4] : memref<16x32xf32, #tpu.memory_space<vmem>>, vector<16x32xf32>
    %cst_5 = arith.constant dense<0.000000e+00> : vector<8x32xf32>
    %18 = tpu.matmul %16, %17, %cst_5 {dimension_numbers = #tpu.dot_dimension_numbers<[1], [0], [0], [1], [0, 0, 1, 1], [], []>} : vector<8x16xf32>, vector<16x32xf32>, vector<8x32xf32> -> vector<8x32xf32>
    %c0_6 = arith.constant 0 : index
    %c0_7 = arith.constant 0 : index
    %19 = vector.load %arg2[%c0_6, %c0_7] : memref<8x32xf32, #tpu.memory_space<vmem>>, vector<8x32xf32>
    %cst_8 = arith.constant dense<0xFF800000> : vector<8xf32>
    %20 = vector.multi_reduction <maximumf>, %19, %cst_8 [1] : vector<8x32xf32> to vector<8xf32>
    %21 = vector.shape_cast %20 : vector<8xf32> to vector<8x1xf32>
    %22 = vector.broadcast %21 : vector<8x1xf32> to vector<8x32xf32>
    %23 = arith.subf %19, %22 : vector<8x32xf32>
    %24 = math.exp %23 : vector<8x32xf32>
    %cst_9 = arith.constant dense<0.000000e+00> : vector<8xf32>
    %25 = vector.multi_reduction <add>, %24, %cst_9 [1] : vector<8x32xf32> to vector<8xf32>
    %26 = vector.shape_cast %25 : vector<8xf32> to vector<8x1xf32>
    %27 = math.log %26 : vector<8x1xf32>
    %28 = arith.mulf %18, %23 : vector<8x32xf32>
    %cst_10 = arith.constant dense<0.000000e+00> : vector<8xf32>
    %29 = vector.multi_reduction <add>, %28, %cst_10 [1] : vector<8x32xf32> to vector<8xf32>
    %30 = vector.shape_cast %29 : vector<8xf32> to vector<8x1xf32>
    %cst_11 = arith.constant dense<0.000000e+00> : vector<8xf32>
    %31 = vector.multi_reduction <add>, %18, %cst_11 [1] : vector<8x32xf32> to vector<8xf32>
    %32 = vector.shape_cast %31 : vector<8xf32> to vector<8x1xf32>
    %33 = arith.mulf %32, %27 : vector<8x1xf32>
    %34 = arith.subf %30, %33 : vector<8x1xf32>
    %c8_i32 = arith.constant 8 : i32
    %35 = arith.muli %arg0, %c8_i32 : i32
    %36 = tpu.iota {dimensions = array<i32: 0>} : vector<8x1xi32>
    %37 = vector.broadcast %35 : i32 to vector<8x1xi32>
    %38 = arith.addi %37, %36 : vector<8x1xi32>
    %c8_i32_12 = arith.constant 8 : i32
    %39 = vector.broadcast %c8_i32_12 : i32 to vector<8x1xi32>
    %40 = arith.cmpi slt, %38, %39 : vector<8x1xi32>
    %cst_13 = arith.constant 0.000000e+00 : f32
    %41 = vector.broadcast %cst_13 : f32 to vector<8x1xf32>
    %42 = arith.select %40, %34, %41 : vector<8x1xi1>, vector<8x1xf32>
    %43 = vector.shape_cast %42 : vector<8x1xf32> to vector<1x8x1xf32>
    %cst_14 = arith.constant dense<0.000000e+00> : vector<1xf32>
    %44 = vector.multi_reduction <add>, %43, %cst_14 [1, 2] : vector<1x8x1xf32> to vector<1xf32>
    %45 = vector.shape_cast %44 : vector<1xf32> to vector<1x1x1xf32>
    %46 = vector.extract %45[0, 0, 0] : f32 from vector<1x1x1xf32>
    %c0_15 = arith.constant 0 : index
    %c0_16 = arith.constant 0 : index
    %47 = vector.load %arg4[%c0_15, %c0_16] : memref<1x1xf32, #tpu.memory_space<vmem>>, vector<1x1xf32>
    %cst_17 = arith.constant 0.000000e+00 : f32
    %48 = arith.subf %cst_17, %46 : f32
    %49 = vector.broadcast %48 : f32 to vector<1x1xf32>
    %50 = arith.addf %47, %49 : vector<1x1xf32>
    %c0_18 = arith.constant 0 : index
    %c0_19 = arith.constant 0 : index
    %51 = vector.load %arg4[%c0_18, %c0_19] : memref<1x1xf32, #tpu.memory_space<vmem>>, vector<1x1xf32>
    tpu.vector_store %arg4[%c0_18, %c0_19], %50 {strides = array<i32>} : memref<1x1xf32, #tpu.memory_space<vmem>>, vector<1x1xf32>,
    %c0_i32_20 = arith.constant 0 : i32
    %52 = arith.cmpi eq, %arg0, %c0_i32_20 : i32
    %53 = arith.extui %52 : i1 to i32
    %c0_i32_21 = arith.constant 0 : i32
    %54 = arith.cmpi ne, %53, %c0_i32_21 : i32
    scf.if %54 {
      %c0_22 = arith.constant 0 : index
      %c0_23 = arith.constant 0 : index
      %55 = vector.load %arg4[%c0_22, %c0_23] : memref<1x1xf32, #tpu.memory_space<vmem>>, vector<1x1xf32>
      %cst_24 = arith.constant 1.250000e-01 : f32
      %56 = vector.broadcast %cst_24 : f32 to vector<1x1xf32>
      %57 = arith.mulf %55, %56 : vector<1x1xf32>
      %c0_25 = arith.constant 0 : index
      %c0_26 = arith.constant 0 : index
      %58 = vector.load %arg4[%c0_25, %c0_26] : memref<1x1xf32, #tpu.memory_space<vmem>>, vector<1x1xf32>
      tpu.vector_store %arg4[%c0_25, %c0_26], %57 {strides = array<i32>} : memref<1x1xf32, #tpu.memory_space<vmem>>, vector<1x1xf32>,
    } else {
    }
    return
  }
  func.func @transform_0(%arg0: i32) -> (i32, i32) {
    %c0_i32 = arith.constant 0 : i32
    %c0_i32_0 = arith.constant 0 : i32
    return %arg0, %c0_i32 : i32, i32
  }
  func.func @transform_1(%arg0: i32) -> (i32, i32) {
    %c0_i32 = arith.constant 0 : i32
    %c0_i32_0 = arith.constant 0 : i32
    return %arg0, %c0_i32 : i32, i32
  }
  func.func @transform_2(%arg0: i32) -> (i32, i32) {
    %c0_i32 = arith.constant 0 : i32
    %c0_i32_0 = arith.constant 0 : i32
    %c0_i32_1 = arith.constant 0 : i32
    return %c0_i32, %c0_i32_0 : i32, i32
  }
  func.func @transform_3(%arg0: i32) -> (i32, i32) {
    %c0_i32 = arith.constant 0 : i32
    %c0_i32_0 = arith.constant 0 : i32
    %c0_i32_1 = arith.constant 0 : i32
    return %c0_i32, %c0_i32_0 : i32, i32
  }
}

</mosaic_0001>

<llo_original>
// kernel: consistency_loss.1
$region0: #{consistency_loss.1}
  #allocation0 [shape = 'u32[]', space=smem, size = 0x4, offset = 0x4, fixed_abs, tag = 'smem constant byte address 0x4 - core index']
  #allocation1 [shape = 'u32[144,128]{1,0:T(1,128)}', space=vmem, size = 0x12000, scoped, tag = 'internal scratch']
  %s0 = inlined_call_operand.hbm [shape: f32[8,16], index: 0, kind: input, shape index: {}]
  %s1 = inlined_call_operand.hbm [shape: f32[8,32], index: 1, kind: input, shape index: {}]
  %s2 = inlined_call_operand.hbm [shape: f32[16,32], index: 2, kind: input, shape index: {}]
  %s3 = inlined_call_operand.hbm [shape: f32[1,1], index: 3, kind: output, shape index: {}]
  %s4 = sld [smem:[#allocation0]]
  $region42: #{consistency_loss.1} parent=0
    _
  %s6 = ssub.s32 1, %s4
  %s7 = scalar_select 0, %s6, %s4
  $region1: #{consistency_loss.1} parent=0
    #allocation2 [shape = 'u8[4096]{0}', space=vmem, size = 0x1000, scoped, tag = 'input window, operand 0, single buffered']
    #allocation3 [shape = 's32[1]{0}', space=sflag, size = 0x4, scoped, tag = 'scoped memory for consistency_loss.1']
    #allocation4 [shape = 's32[1]{0}', space=sflag, size = 0x4, scoped, tag = 'scoped memory for consistency_loss.1']
    #allocation5 [shape = 'u8[4096]{0}', space=vmem, size = 0x1000, scoped, tag = 'input window, operand 1, single buffered']
    #allocation6 [shape = 's32[1]{0}', space=sflag, size = 0x4, scoped, tag = 'scoped memory for consistency_loss.1']
    #allocation7 [shape = 'u8[8192]{0}', space=vmem, size = 0x2000, scoped, tag = 'input window, operand 2, single buffered']
    #allocation8 [shape = 'u8[512]{0}', space=vmem, size = 0x400, scoped, tag = 'output window, operand 0, single buffered']
    %8 = vsyncpa [#allocation3], 0
    %9 = vsyncpa [#allocation6], 0
    %10 = vsyncpa [#allocation4], 0
    // Predicated region
    $region2: #{consistency_loss.1} parent=1 // pred_check
      _
    $region3: #{consistency_loss.1} parent=1 // pred_check_branch
      %12 = sbr.rel (0) target = $region5
    $region4: #{consistency_loss.1} parent=1 // pred_region
      %s14 = ssub.s32 128, 128
      %15 = vsyncadd [#allocation3], %s14
      %s17 = sshll.u32 [#allocation2], 4
      %s18 = int_to_ptr.vmem [resolvable:$true] %s17
      %20 = dma.hbm_to_vmem [thread:$0]  %s0, 128, %s18, [#allocation3]
    $region5: #{consistency_loss.1} parent=1 // pred_fallthru
      _
    // Predicated region
    $region6: #{consistency_loss.1} parent=1 // pred_check
      _
    $region7: #{consistency_loss.1} parent=1 // pred_check_branch
      %22 = sbr.rel (0) target = $region9
    $region8: #{consistency_loss.1} parent=1 // pred_region
      %s24 = ssub.s32 128, 128
      %25 = vsyncadd [#allocation6], %s24
      %s27 = sshll.u32 [#allocation5], 4
      %s28 = int_to_ptr.vmem [resolvable:$true] %s27
      %30 = dma.hbm_to_vmem [thread:$0]  %s1, 128, %s28, [#allocation6]
    $region9: #{consistency_loss.1} parent=1 // pred_fallthru
      _
    // Predicated region
    $region10: #{consistency_loss.1} parent=1 // pred_check
      _
    $region11: #{consistency_loss.1} parent=1 // pred_check_branch
      %32 = sbr.rel (0) target = $region13
    $region12: #{consistency_loss.1} parent=1 // pred_region
      %s34 = ssub.s32 256, 256
      %35 = vsyncadd [#allocation6], %s34
      %s36 = sshll.u32 [#allocation7], 4
      %s37 = int_to_ptr.vmem [resolvable:$true] %s36
      %42 = dma.hbm_to_vmem [thread:$0]  %s2, 256, %s37, [#allocation6], 128, 128, 8
    $region13: #{consistency_loss.1} parent=1 // pred_fallthru
      _
    // Predicated region
    $region14: #{consistency_loss.1} parent=1 // pred_check
      _
    $region15: #{consistency_loss.1} parent=1 // pred_check_branch
      %44 = sbr.rel (0) target = $region17
    $region16: #{consistency_loss.1} parent=1 // pred_region
      %45 = dma.done [#allocation3], 128
    $region17: #{consistency_loss.1} parent=1 // pred_fallthru
      _
    // Predicated region
    $region18: #{consistency_loss.1} parent=1 // pred_check
      _
    $region19: #{consistency_loss.1} parent=1 // pred_check_branch
      %47 = sbr.rel (0) target = $region21
    $region20: #{consistency_loss.1} parent=1 // pred_region
      %48 = dma.done [#allocation6], 128
    $region21: #{consistency_loss.1} parent=1 // pred_fallthru
      _
    // Predicated region
    $region22: #{consistency_loss.1} parent=1 // pred_check
      _
    $region23: #{consistency_loss.1} parent=1 // pred_check_branch
      %50 = sbr.rel (0) target = $region25
    $region24: #{consistency_loss.1} parent=1 // pred_region
      %51 = dma.done [#allocation6], 256
    $region25: #{consistency_loss.1} parent=1 // pred_fallthru
      _
    %p52 = scmp.eq.s32.totalorder 0, 0
    // Predicated region
    $region26: #{consistency_loss.1} parent=1 // pred_check
      %p53 = pneg %p52
    $region27: #{consistency_loss.1} parent=1 // pred_check_branch
      %55 = sbr.rel (%p53) target = $region29
    $region28: #{consistency_loss.1} parent=1 // pred_region
      %vm56 = vcmask 0
      %57 = vst.msk [vmem:[#allocation8] sm:$0x1] %vm56, 0.0
    $region29: #{consistency_loss.1} parent=1 // pred_fallthru
      _
    %v58 = vld [vmem:[#allocation2] sm:$0xff]
    %v59 = vlaneseq
    %v60 = vand.u32 %v59, 127
    %vm61 = vcmask 130048
    %v62 = vsel %vm61, %v58, -inf
    %63 = vmax.xlane.f32.xlu0 %v62
    %v64 = vpop.xlane.xlu0 %63
    %vm65 = vcmp.eq.f32.partialorder %v58, %v64
    %v66 = vsel %vm65, %v60, 16
    %v67 = vsel %vm61, %v66, 2147483647
    %v68 = vand.u32 %v67, 65535
    %v69 = vshra.s32 %v67, 16
    %v70 = vcvt.s32.f32 %v68
    %v71 = vcvt.s32.f32 %v69
    %72 = vmin.xlane.f32.xlu0 %v71
    %v73 = vpop.xlane.xlu0 %72
    %vm74 = vcmp.eq.f32.partialorder %v71, %v73
    %v75 = vsel %vm74, %v70, inf
    %76 = vmin.xlane.f32.xlu0 %v75
    %v77 = vpop.xlane.xlu0 %76
    %v78 = vcvt.f32.s32 %v77
    %v79 = vcvt.f32.s32 %v73
    %v80 = vshll.u32 %v79, 16
    %v81 = vadd.s32 %v80, %v78
    %vm82 = vcmp.eq.s32.totalorder %v60, %v81
    %v83 = vsel %vm82, 1, 0
    %v84 = vcvt.s32.f32 %v83
    %v85 = vld [vmem:[#allocation7] sm:$0xff]
    %v86 = vld [vmem:[#allocation7 + $0x8] sm:$0xff]
    %v88 = vsel %vm61, %v84, 0
    %90 = vmatprep.subr.mxu0 0.0
    %91 = vmatpush1.msra.mxu0 0.0
    %92 = vmatprep.subr.mxu0 0.0
    %93 = vmatpush1.msra.mxu0 0.0
    %94 = vmatprep.subr.mxu0 0.0
    %95 = vmatpush1.msra.mxu0 0.0
    %96 = vmatprep.subr.mxu0 0.0
    %97 = vmatpush1.msra.mxu0 0.0
    %98 = vmatprep.subr.mxu0 0.0
    %99 = vmatpush1.msra.mxu0 0.0
    %100 = vmatprep.subr.mxu0 0.0
    %101 = vmatpush1.msra.mxu0 0.0
    %102 = vmatprep.subr.mxu0 0.0
    %103 = vmatpush1.msra.mxu0 0.0
    %104 = vmatprep.subr.mxu0 0.0
    %105 = vmatpush1.msra.mxu0 0.0
    %106 = vmatprep.subr.mxu0 0.0
    %107 = vmatpush1.msra.mxu0 0.0
    %108 = vmatprep.subr.mxu0 0.0
    %109 = vmatpush1.msra.mxu0 0.0
    %110 = vmatprep.subr.mxu0 0.0
    %111 = vmatpush1.msra.mxu0 0.0
    %112 = vmatprep.subr.mxu0 0.0
    %113 = vmatpush1.msra.mxu0 0.0
    %114 = vmatprep.subr.mxu0 0.0
    %115 = vmatpush1.msra.mxu0 0.0
    %116 = vmatprep.subr.mxu0 0.0
    %117 = vmatpush1.msra.mxu0 0.0
    %118 = vmatprep.subr.mxu0 0.0
    %119 = vmatpush1.msra.mxu0 %v86
    %120 = vmatprep.subr.mxu0 0.0
    %121 = vmatpush1.msra.mxu0 %v85
    %122 = vmatprep.subr.mxu0 0.0
    %123 = vmatpush2.msra.mxu0 0.0
    %124 = vmatprep.subr.mxu0 0.0
    %125 = vmatpush2.msra.mxu0 0.0
    %126 = vmatprep.subr.mxu0 0.0
    %127 = vmatpush2.msra.mxu0 0.0
    %128 = vmatprep.subr.mxu0 0.0
    %129 = vmatpush2.msra.mxu0 0.0
    %130 = vmatprep.subr.mxu0 0.0
    %131 = vmatpush2.msra.mxu0 0.0
    %132 = vmatprep.subr.mxu0 0.0
    %133 = vmatpush2.msra.mxu0 0.0
    %134 = vmatprep.subr.mxu0 0.0
    %135 = vmatpush2.msra.mxu0 0.0
    %136 = vmatprep.subr.mxu0 0.0
    %137 = vmatpush2.msra.mxu0 0.0
    %138 = vmatprep.subr.mxu0 0.0
    %139 = vmatpush2.msra.mxu0 0.0
    %140 = vmatprep.subr.mxu0 0.0
    %141 = vmatpush2.msra.mxu0 0.0
    %142 = vmatprep.subr.mxu0 0.0
    %143 = vmatpush2.msra.mxu0 0.0
    %144 = vmatprep.subr.mxu0 0.0
    %145 = vmatpush2.msra.mxu0 0.0
    %146 = vmatprep.subr.mxu0 0.0
    %147 = vmatpush2.msra.mxu0 0.0
    %148 = vmatprep.subr.mxu0 0.0
    %149 = vmatpush2.msra.mxu0 0.0
    %150 = vmatprep.subr.mxu0 0.0
    %151 = vmatpush2.msra.mxu0 0.0
    %152 = vmatprep.subr.mxu0 0.0
    %153 = vmatpush2.msra.mxu0 0.0
    %154 = vmatprep.mubr.f32.mxu0 0.0
    %155 = vmatmul.mubr.f32.gmra.mxu0 %v88
    %v156 = vpop.f32.mrf.mxu0
    %v157 = vadd.f32 0.0, %v156
    %v158 = vpop.f32.mrf.mxu0
    %159 = vdwg.mxu0
    %v160 = vld [vmem:[#allocation5] sm:$0xff]
    %vm161 = vcmask 261120
    %v162 = vsel %vm161, %v160, -inf
    %163 = vmax.xlane.f32.xlu0 %v162
    %v164 = vpop.xlane.xlu0 %163
    %v165 = vsub.f32 %v160, %v164
    %v166 = vmul.f32 %v165, 1.442695
    %v167 = vpow.pop %v166
    %v168 = vsel %vm161, %v167, 0.0
    %169 = vadd.xlane.f32.xlu0 %v168
    %v170 = vpop.xlane.xlu0 %169
    %v171 = vlog2.pop %v170
    %v172 = vmul.f32 %v171, 0.6931472
    %v173 = vmul.f32 %v157, %v165
    %v174 = vsel %vm161, %v173, 0.0
    %175 = vadd.xlane.f32.xlu0 %v174
    %v176 = vpop.xlane.xlu0 %175
    %v177 = vsel %vm161, %v157, 0.0
    %178 = vadd.xlane.f32.xlu0 %v177
    %v179 = vpop.xlane.xlu0 %178
    %v180 = vmul.f32 %v179, %v172
    %v181 = vsub.f32 %v176, %v180
    %s182 = smul.u32 0, 8
    %v183 = vlaneseq
    %v184 = vshrl.u32 %v183, 7
    %v185 = vstv %s182
    %v186 = vadd.s32 %v185, %v184
    %vm187 = vcmp.lt.s32.totalorder %v186, 8
    %v188 = vsel %vm187, %v181, 0.0
    %vm189 = vcmask 7168
    %v190 = vsel %vm189, %v188, 0.0
    %191 = vadd.xlane.f32.xlu0 %v190
    %v192 = vpop.xlane.xlu0 %191
    %v193 = vrot.slane %v192, 4
    %v194 = vadd.f32 %v192, %v193
    %v195 = vrot.slane %v194, 2
    %v196 = vadd.f32 %v194, %v195
    %v197 = vrot.slane %v196, 1
    %v198 = vadd.f32 %v196, %v197
    %s199 = vtos %v198
    %v200 = vld [vmem:[#allocation8] sm:$0x1]
    %s201 = ssub.f32 0.0, %s199
    %v202 = vstv %s201
    %v203 = vadd.f32 %v200, %v202
    %vm204 = vcmask 0
    %205 = vst.msk [vmem:[#allocation8] sm:$0x1] %vm204, %v203
    // Predicated region
    $region30: #{consistency_loss.1} parent=1 // pred_check
      %p206 = pneg %p52
    $region31: #{consistency_loss.1} parent=1 // pred_check_branch
      %208 = sbr.rel (%p206) target = $region33
    $region32: #{consistency_loss.1} parent=1 // pred_region
      %v209 = vld [vmem:[#allocation8] sm:$0x1]
      %v210 = vmul.f32 %v209, 0.125
      %211 = vst.msk [vmem:[#allocation8] sm:$0x1] %vm204, %v210
    $region33: #{consistency_loss.1} parent=1 // pred_fallthru
      _
    // Predicated region
    $region34: #{consistency_loss.1} parent=1 // pred_check
      _
    $region35: #{consistency_loss.1} parent=1 // pred_check_branch
      %213 = sbr.rel (0) target = $region37
    $region36: #{consistency_loss.1} parent=1 // pred_region
      %s215 = ssub.s32 16, 16
      %216 = vsyncadd [#allocation4], %s215
      %s218 = sshll.u32 [#allocation8], 4
      %s219 = int_to_ptr.vmem [resolvable:$true] %s218
      %221 = dma.vmem_to_hbm [thread:$0]  %s219, 16, %s3, [#allocation4]
    $region37: #{consistency_loss.1} parent=1 // pred_fallthru
      _
    // Predicated region
    $region38: #{consistency_loss.1} parent=1 // pred_check
      _
    $region39: #{consistency_loss.1} parent=1 // pred_check_branch
      %223 = sbr.rel (0) target = $region41
    $region40: #{consistency_loss.1} parent=1 // pred_region
      %224 = dma.done [#allocation4], 16
    $region41: #{consistency_loss.1} parent=1 // pred_fallthru
      _
    %225 = vsyncpa [#allocation3], 1
    %226 = vsyncpa [#allocation6], 1
    %227 = vsyncpa [#allocation4], 1

</llo_original>
